<compile_context>
chip_gen: v5e
topology: v5e:2x2
jax: 0.10.0
libtpu: 0.0.40
codegen_flags: <defaults>
</compile_context>

<pallas_src>
import math

import jax
import jax.numpy as jnp
from jax.experimental import pallas as pl
from jax.experimental.pallas import tpu as pltpu


def _round_up(x, m):
    return -(-x // m) * m


# ---------------------------------------------------------------------------
# Kernels
# ---------------------------------------------------------------------------

def _anet_packed_kernel(x_ref, w_ref, b_ref, o_ref):
    """x_ref: [TILE_R, 128] packed rows (native dtype), each row holds
    P = 128 // F consecutive examples' features.
    w_ref: [128, P] block-diagonal replicated weight (f32, resident).
    b_ref: [1, 1] bias scalar in SMEM.  o_ref: [TILE_R, P] f32."""
    x = x_ref[...].astype(jnp.float32)                    # in-kernel upcast
    y = jnp.dot(x, w_ref[...], preferred_element_type=jnp.float32)
    y = y + b_ref[0, 0]                                   # scalar SMEM read
    o_ref[...] = jax.nn.sigmoid(y).astype(o_ref.dtype)    # exp on EUP


def _anet_lane_dense_kernel(x_ref, w_ref, b_ref, o_ref):
    """Generic path: x_ref [TILE_B, F] (native dtype), w_ref [1, F] f32,
    o_ref [1, TILE_B] (batch on lanes -> lane-dense store)."""
    x = x_ref[...].astype(jnp.float32)
    # w[1,F] . x^T[F,TILE_B] -> [1,TILE_B] via contraction over F (no
    # materialized transpose in the kernel body).
    y = jax.lax.dot_general(
        w_ref[...], x,
        dimension_numbers=(((1,), (1,)), ((), ())),
        preferred_element_type=jnp.float32,
    )
    y = y + b_ref[0, 0]
    o_ref[...] = jax.nn.sigmoid(y).astype(o_ref.dtype)


# ---------------------------------------------------------------------------
# Tiling
# ---------------------------------------------------------------------------

def _pick_tile_rows(n_rows, row_bytes_vmem, *, vmem_budget=8 << 20, min_steps=4):
    """Rows per grid step, sized by bytes-per-step.

    `row_bytes_vmem` is the VMEM footprint of one row with the last dim padded
    to 128 lanes.  Budget covers the double-buffered x tiles (the resident
    weight tile is negligible).  Capped so the grid keeps >= min_steps steps
    when the batch allows, so dimension_semantics=("parallel",) can shard the
    batch across TensorCores on v7x and the pipeline has work to overlap.
    """
    rows = vmem_budget // (2 * row_bytes_vmem)            # 2 = double buffering
    rows = max(128, (rows // 128) * 128)
    steps_cap = max(128, _round_up(pl.cdiv(n_rows, min_steps), 128))
    return int(min(rows, steps_cap))


# ---------------------------------------------------------------------------
# Wrapper
# ---------------------------------------------------------------------------

def anet_forward(x, weight, bias, *, block_rows=None):
    """ANet forward: sigmoid(x @ weight.T + bias).

    x: [B, F] (any float dtype), weight: [1, F] (PyTorch nn.Linear layout),
    bias: [1].  Returns [B, 1] f32.  `block_rows` optionally overrides the
    rows-per-step (packed rows on the fast path, batch rows on the fallback).
    """
    B, F = x.shape
    w = weight.astype(jnp.float32).reshape(1, F)
    b = bias.astype(jnp.float32).reshape(1, 1)
    itemsize = jnp.dtype(x.dtype).itemsize
    params = pltpu.CompilerParams(dimension_semantics=("parallel",))

    # ---- Fast path: repack x so every sublane row is a dense 128-lane vector.
    if F <= 128 and 128 % F == 0 and B % (128 // F) == 0:
        P = 128 // F
        R = B // P
        x_packed = x.reshape(R, 128)            # same element order -> no copy
        # Block-diagonal replicated weight: W[j*F + f, j] = w[f].
        w_bd = (jnp.eye(P, dtype=jnp.float32)[:, None, :]
                * w.reshape(F)[None, :, None]).reshape(128, P)

        tile_r = _pick_tile_rows(R, 128 * itemsize) if block_rows is None \
            else int(block_rows)
        if tile_r >= R:
            tile_r = R                           # single block == full dims
        else:
            tile_r = max(8, (tile_r // 8) * 8)   # sublane-aligned tile
        grid = (pl.cdiv(R, tile_r),)             # non-dividing grid is fine

        out = pl.pallas_call(
            _anet_packed_kernel,
            out_shape=jax.ShapeDtypeStruct((R, P), jnp.float32),
            grid_spec=pltpu.PrefetchScalarGridSpec(
                num_scalar_prefetch=0,
                grid=grid,
                in_specs=[
                    pl.BlockSpec((tile_r, 128), lambda i: (i, 0)),        # x
                    pl.BlockSpec((128, P), lambda i: (0, 0)),             # W_bd
                    pl.BlockSpec(memory_space=pltpu.MemorySpace.SMEM),    # bias
                ],
                out_specs=pl.BlockSpec((tile_r, P), lambda i: (i, 0)),
            ),
            compiler_params=params,
        )(x_packed, w_bd, b)
        # Row-major flatten of (R, P) is exactly batch order.
        return out.reshape(B, 1)

    # ---- Generic path: lane-dense (1, TILE_B) output, no wrapper-side pad.
    tile_b = _pick_tile_rows(B, _round_up(F, 128) * itemsize) if block_rows is None \
        else int(block_rows)
    if tile_b >= B:
        tile_b = B                               # single block == full dims
    else:
        tile_b = max(128, (tile_b // 128) * 128)  # out block needs 128 lanes
    grid = (pl.cdiv(B, tile_b),)

    out = pl.pallas_call(
        _anet_lane_dense_kernel,
        out_shape=jax.ShapeDtypeStruct((1, B), jnp.float32),
        grid_spec=pltpu.PrefetchScalarGridSpec(
            num_scalar_prefetch=0,
            grid=grid,
            in_specs=[
                pl.BlockSpec((tile_b, F), lambda i: (i, 0)),          # x tile
                pl.BlockSpec((1, F), lambda i: (0, 0)),               # weight
                pl.BlockSpec(memory_space=pltpu.MemorySpace.SMEM),    # bias
            ],
            out_specs=pl.BlockSpec((1, tile_b), lambda i: (0, i)),    # lane-dense
        ),
        compiler_params=params,
    )(x, w, b)
    return out[0].reshape(B, 1)


if __name__ == "__main__":
    key = jax.random.PRNGKey(0)
    k_x, k_w, k_b, k_x2, k_x3 = jax.random.split(key, 5)

    # --- Case 1: small shapes matching the PyTorch module (packed fast path).
    B, in_feature = 8, 32
    bound = 1.0 / math.sqrt(in_feature)  # PyTorch nn.Linear default init range
    weight = jax.random.uniform(
        k_w, (1, in_feature), minval=-bound, maxval=bound, dtype=jnp.float32)
    bias = jax.random.uniform(
        k_b, (1,), minval=-bound, maxval=bound, dtype=jnp.float32)
    x = jax.random.normal(k_x, (B, in_feature), dtype=jnp.float32)

    out = jax.block_until_ready(anet_forward(x, weight, bias))
    ref = jax.nn.sigmoid(x @ weight.T + bias)
    assert out.shape == (B, 1)
    assert jnp.allclose(out, ref, atol=1e-5, rtol=1e-5)

    # --- Case 2: packed path, multi-step grid with a partial last block.
    B2 = 300                      # R = 75 packed rows; tile 32 -> 3 grid steps
    x2 = jax.random.normal(k_x2, (B2, in_feature), dtype=jnp.float32)
    out2 = jax.block_until_ready(anet_forward(x2, weight, bias, block_rows=32))
    ref2 = jax.nn.sigmoid(x2 @ weight.T + bias)
    assert out2.shape == (B2, 1)
    assert jnp.allclose(out2, ref2, atol=1e-5, rtol=1e-5)

    # --- Case 3: generic lane-dense path (B not a multiple of 128/F), with a
    #     non-dividing batch grid and no wrapper-side padding copy.
    B3 = 301
    x3 = jax.random.normal(k_x3, (B3, in_feature), dtype=jnp.float32)
    out3 = jax.block_until_ready(anet_forward(x3, weight, bias, block_rows=128))
    ref3 = jax.nn.sigmoid(x3 @ weight.T + bias)
    assert out3.shape == (B3, 1)
    assert jnp.allclose(out3, ref3, atol=1e-5, rtol=1e-5)

    print("KERNEL_OK")
</pallas_src>

<mosaic_0001>
module attributes {stable_mosaic.version = 11 : i64} {
  func.func @_anet_packed_kernel(%arg0: i32, %arg1: memref<2x128xf32, #tpu.memory_space<vmem>>, %arg2: memref<128x4xf32, #tpu.memory_space<vmem>>, %arg3: memref<1x1xf32, #tpu.memory_space<smem>>, %arg4: memref<2x4xf32, #tpu.memory_space<vmem>>) attributes {dimension_semantics = [#tpu.dimension_semantics<parallel>], iteration_bounds = array<i64: 1>, scalar_prefetch = 0 : i64, scratch_operands = 0 : i64, tpu.core_type = #tpu.core_type<tc>, window_params = [{transform_indices = @transform_0, window_bounds = array<i64: 2, 128>}, {pipeline_mode = #tpu.pipeline_mode<synchronous>, transform_indices = @transform_1, window_bounds = array<i64: 128, 4>}, {transform_indices = @transform_2, window_bounds = array<i64: 1, 1>}, {transform_indices = @transform_3, window_bounds = array<i64: 2, 4>}]} {
    %c0 = arith.constant 0 : index
    %c0_0 = arith.constant 0 : index
    %0 = vector.load %arg1[%c0, %c0_0] : memref<2x128xf32, #tpu.memory_space<vmem>>, vector<2x128xf32>
    %c0_1 = arith.constant 0 : index
    %c0_2 = arith.constant 0 : index
    %1 = vector.load %arg2[%c0_1, %c0_2] : memref<128x4xf32, #tpu.memory_space<vmem>>, vector<128x4xf32>
    %cst = arith.constant dense<0.000000e+00> : vector<2x4xf32>
    %2 = tpu.matmul %0, %1, %cst {dimension_numbers = #tpu.dot_dimension_numbers<[1], [0], [0], [1], [0, 0, 1, 1], [], []>} : vector<2x128xf32>, vector<128x4xf32>, vector<2x4xf32> -> vector<2x4xf32>
    %c0_3 = arith.constant 0 : index
    %c0_4 = arith.constant 0 : index
    %3 = memref.load %arg3[%c0_3, %c0_4] : memref<1x1xf32, #tpu.memory_space<smem>>
    %4 = vector.broadcast %3 : f32 to vector<2x4xf32>
    %5 = arith.addf %2, %4 : vector<2x4xf32>
    %6 = arith.negf %5 : vector<2x4xf32>
    %7 = math.exp %6 : vector<2x4xf32>
    %cst_5 = arith.constant 1.000000e+00 : f32
    %8 = vector.broadcast %cst_5 : f32 to vector<2x4xf32>
    %9 = arith.addf %8, %7 : vector<2x4xf32>
    %10 = arith.divf %8, %9 : vector<2x4xf32>
    %c0_6 = arith.constant 0 : index
    %c0_7 = arith.constant 0 : index
    %11 = vector.load %arg4[%c0_6, %c0_7] : memref<2x4xf32, #tpu.memory_space<vmem>>, vector<2x4xf32>
    tpu.vector_store %arg4[%c0_6, %c0_7], %10 {strides = array<i32>} : memref<2x4xf32, #tpu.memory_space<vmem>>, vector<2x4xf32>,
    return
  }
  func.func @transform_0(%arg0: i32) -> (i32, i32) {
    %c0_i32 = arith.constant 0 : i32
    %c0_i32_0 = arith.constant 0 : i32
    return %arg0, %c0_i32 : i32, i32
  }
  func.func @transform_1(%arg0: i32) -> (i32, i32) {
    %c0_i32 = arith.constant 0 : i32
    %c0_i32_0 = arith.constant 0 : i32
    %c0_i32_1 = arith.constant 0 : i32
    return %c0_i32, %c0_i32_0 : i32, i32
  }
  func.func @transform_2(%arg0: i32) -> (i32, i32) {
    %c0_i32 = arith.constant 0 : i32
    %c0_i32_0 = arith.constant 0 : i32
    %c0_i32_1 = arith.constant 0 : i32
    return %c0_i32, %c0_i32_0 : i32, i32
  }
  func.func @transform_3(%arg0: i32) -> (i32, i32) {
    %c0_i32 = arith.constant 0 : i32
    %c0_i32_0 = arith.constant 0 : i32
    return %arg0, %c0_i32 : i32, i32
  }
}

</mosaic_0001>

<llo_original>
// kernel: tpu_custom_call.1
$region0: #{tpu_custom_call.1}
  #allocation0 [shape = 'u32[]', space=smem, size = 0x4, offset = 0x4, fixed_abs, tag = 'smem constant byte address 0x4 - core index']
  #allocation1 [shape = 'u32[72,128]{1,0:T(1,128)}', space=vmem, size = 0x9000, scoped, tag = 'internal scratch']
  #allocation2 [shape = 'f32[1,1]{1,0:T(1,128)S(6)}', space=smem, size = 0x200, scoped, tag = 'scoped memory for tpu_custom_call.1']
  %s0 = inlined_call_operand.vmem [shape: f32[2,128], index: 0, kind: input, shape index: {}]
  %s1 = inlined_call_operand.vmem [shape: f32[128,4], index: 1, kind: input, shape index: {}]
  %s2 = inlined_call_operand.<no memory space> [shape: f32[1,1], index: 2, kind: input, shape index: {}]
  %s3 = inlined_call_operand.hbm [shape: f32[2,4], index: 3, kind: output, shape index: {}]
  %s4 = sld [smem:[#allocation0]]
  $region22: #{tpu_custom_call.1} parent=0
    _
  %s6 = ssub.s32 1, %s4
  %s7 = scalar_select 0, %s6, %s4
  %8 = sst [smem:[#allocation2]] %s2
  $region1: #{tpu_custom_call.1} parent=0
    #allocation3 [shape = 'u8[1024]{0}', space=vmem, size = 0x400, scoped, tag = 'output window, operand 0, single buffered']
    #allocation4 [shape = 's32[1]{0}', space=sflag, size = 0x4, scoped, tag = 'scoped memory for tpu_custom_call.1']
    %9 = vsyncpa [#allocation4], 0
    // Predicated region
    $region2: #{tpu_custom_call.1} parent=1 // pred_check
      _
    $region3: #{tpu_custom_call.1} parent=1 // pred_check_branch
      %11 = sbr.rel (0) target = $region5
    $region4: #{tpu_custom_call.1} parent=1 // pred_region
      _
    $region5: #{tpu_custom_call.1} parent=1 // pred_fallthru
      _
    // Predicated region
    $region6: #{tpu_custom_call.1} parent=1 // pred_check
      _
    $region7: #{tpu_custom_call.1} parent=1 // pred_check_branch
      %13 = sbr.rel (0) target = $region9
    $region8: #{tpu_custom_call.1} parent=1 // pred_region
      _
    $region9: #{tpu_custom_call.1} parent=1 // pred_fallthru
      _
    // Predicated region
    $region10: #{tpu_custom_call.1} parent=1 // pred_check
      _
    $region11: #{tpu_custom_call.1} parent=1 // pred_check_branch
      %15 = sbr.rel (0) target = $region13
    $region12: #{tpu_custom_call.1} parent=1 // pred_region
      _
    $region13: #{tpu_custom_call.1} parent=1 // pred_fallthru
      _
    %v16 = vld [vmem:[%s0] sm:$0x3]
    %v17 = vld [vmem:[%s1] sm:$0xff]
    %v18 = vld [vmem:[%s1 + $0x8] sm:$0xff]
    %v19 = vld [vmem:[%s1 + $0x10] sm:$0xff]
    %v20 = vld [vmem:[%s1 + $0x18] sm:$0xff]
    %v21 = vld [vmem:[%s1 + $0x20] sm:$0xff]
    %v22 = vld [vmem:[%s1 + $0x28] sm:$0xff]
    %v23 = vld [vmem:[%s1 + $0x30] sm:$0xff]
    %v24 = vld [vmem:[%s1 + $0x38] sm:$0xff]
    %v25 = vld [vmem:[%s1 + $0x40] sm:$0xff]
    %v26 = vld [vmem:[%s1 + $0x48] sm:$0xff]
    %v27 = vld [vmem:[%s1 + $0x50] sm:$0xff]
    %v28 = vld [vmem:[%s1 + $0x58] sm:$0xff]
    %v29 = vld [vmem:[%s1 + $0x60] sm:$0xff]
    %v30 = vld [vmem:[%s1 + $0x68] sm:$0xff]
    %v31 = vld [vmem:[%s1 + $0x70] sm:$0xff]
    %v32 = vld [vmem:[%s1 + $0x78] sm:$0xff]
    %s33 = sld [smem:[#allocation2]]
    %v34 = vstv %s33
    %35 = vmatpush.msra.mxu0 %v32
    %36 = vmatpush.msra.mxu0 %v31
    %37 = vmatpush.msra.mxu0 %v30
    %38 = vmatpush.msra.mxu0 %v29
    %39 = vmatpush.msra.mxu0 %v28
    %40 = vmatpush.msra.mxu0 %v27
    %41 = vmatpush.msra.mxu0 %v26
    %42 = vmatpush.msra.mxu0 %v25
    %43 = vmatpush.msra.mxu0 %v24
    %44 = vmatpush.msra.mxu0 %v23
    %45 = vmatpush.msra.mxu0 %v22
    %46 = vmatpush.msra.mxu0 %v21
    %47 = vmatpush.msra.mxu0 %v20
    %48 = vmatpush.msra.mxu0 %v19
    %49 = vmatpush.msra.mxu0 %v18
    %50 = vmatpush.msra.mxu0 %v17
    %51 = vmatmul.f32.gmra.mxu0 %v16
    %v52 = vpop.f32.mrf.mxu0
    %v53 = vadd.f32 %v34, %v52
    %54 = vdwg.mxu0
    %v55 = vxor.u32 %v53, 2147483648
    %v56 = vmul.f32 %v55, 1.442695
    %v57 = vpow.pop %v56
    %v58 = vadd.f32 %v57, 1.0
    %v59 = vrcp.pop %v58
    %v60 = vmul.f32 %v58, %v59
    %v61 = vsub.f32 1.0, %v60
    %v62 = vmul.f32 %v59, %v61
    %v63 = vadd.f32 %v59, %v62
    %vm64 = vweird.f32 %v58
    %vm65 = vweird.f32 %v59
    %vm66 = vmor %vm64, %vm65
    %v67 = vsel %vm66, %v59, %v63
    %v68 = vand.u32 2147483647, %v58
    %vm69 = vcmp.eq.f32.partialorder %v68, 8.507059e+37
    %v70 = vand.u32 %v58, 2147483648
    %v71 = vor.u32 1.1754944e-38, %v70
    %v72 = vsel %vm69, %v71, %v67
    %v73 = vmul.f32 1.0, %v72
    %vm74 = vcmask 25600
    %75 = vst.msk [vmem:[#allocation3] sm:$0x3] %vm74, %v73
    // Predicated region
    $region14: #{tpu_custom_call.1} parent=1 // pred_check
      _
    $region15: #{tpu_custom_call.1} parent=1 // pred_check_branch
      %77 = sbr.rel (0) target = $region17
    $region16: #{tpu_custom_call.1} parent=1 // pred_region
      %79 = vsyncadd [#allocation4], 0
      %s81 = sshll.u32 [#allocation3], 4
      %s82 = int_to_ptr.vmem [resolvable:$true] %s81
      %s83 = sshll.u32 %s3, 4
      %s84 = int_to_ptr.hbm [resolvable:$true] %s83
      %86 = dma.vmem_to_hbm [thread:$0]  %s82, 32, %s84, [#allocation4]
    $region17: #{tpu_custom_call.1} parent=1 // pred_fallthru
      _
    // Predicated region
    $region18: #{tpu_custom_call.1} parent=1 // pred_check
      _
    $region19: #{tpu_custom_call.1} parent=1 // pred_check_branch
      %88 = sbr.rel (0) target = $region21
    $region20: #{tpu_custom_call.1} parent=1 // pred_region
      %90 = dma.done [#allocation4], 32
    $region21: #{tpu_custom_call.1} parent=1 // pred_fallthru
      _
    %91 = vsyncpa [#allocation4], 1

</llo_original>
